<compile_context>
chip_gen: v7x
topology: tpu7x:2x2x1
jax: 0.10.0
libtpu: 0.0.40
codegen_flags: <defaults>
</compile_context>

<pallas_src>
import jax
import jax.numpy as jnp
from jax.experimental import pallas as pl
from jax.experimental.pallas import tpu as pltpu

LANE = 512                 # lane-dense last dim (multiple of 128) -> unmasked vst, full vregs
TILE_R = 2048              # 2048 x 512 x 4B = 4 MiB per f32 block (review: v7x/v6e sweet spot)
BLOCK_1D = 1 << 20         # 1 Mi elements = 4 MiB f32 per block on the unaligned 1-D path
MIN_PALLAS_ELEMS = 256 * 1024  # below ~1 MiB (f32) use the plain-XLA fast path


def _affine_kernel(wb_ref, x_ref, o_ref):
    # wb_ref: SMEM (2,) f32 array holding [weight, bias]; x_ref/o_ref: VMEM tiles (1-D or 2-D).
    w = wb_ref[0]
    b = wb_ref[1]
    o_ref[...] = (x_ref[...] * w + b).astype(o_ref.dtype)


def _affine_pallas(slab, wb, block_shape, grid, alias_input):
    """Run the scalar-affine kernel over `slab` (1-D or 2-D) with the given tiling."""
    if len(block_shape) == 2:
        index_map = lambda i: (i, 0)
    else:
        index_map = lambda i: (i,)

    total = slab.size
    bytes_per_elem = jnp.dtype(slab.dtype).itemsize
    extra = {}
    if alias_input:
        # Only beneficial when the caller donates x / x is already a temporary; otherwise XLA
        # inserts a defensive copy of the input to satisfy the alias.
        extra["input_output_aliases"] = {1: 0}

    return pl.pallas_call(
        _affine_kernel,
        out_shape=jax.ShapeDtypeStruct(slab.shape, slab.dtype),
        grid=grid,
        in_specs=[
            pl.BlockSpec(memory_space=pltpu.SMEM),   # [w, b] scalars (f32)
            pl.BlockSpec(block_shape, index_map),    # streamed input tile
        ],
        out_specs=pl.BlockSpec(block_shape, index_map),
        compiler_params=pltpu.CompilerParams(
            dimension_semantics=("parallel",),       # no cross-step carry
            vmem_limit_bytes=32 * 1024 * 1024,       # 4 MiB blocks, double-buffered in+out
        ),
        cost_estimate=pl.CostEstimate(
            flops=2 * total,
            transcendentals=0,
            bytes_accessed=2 * total * bytes_per_elem,
        ),
        **extra,
    )(wb, slab)


def one_oper_model(
    x_nchw: jax.Array,
    weight: jax.Array,
    bias: jax.Array,
    *,
    min_pallas_elems: int = MIN_PALLAS_ELEMS,
    block_1d: int = BLOCK_1D,
    alias_input: bool = False,
) -> jax.Array:
    """Pallas implementation of OneOperModel.forward (Conv2d(1,1,1) == scalar affine).

    Args:
      x_nchw: (N, 1, H, W) input (NCHW, matching PyTorch).
      weight: conv weight of shape (1, 1, 1, 1).
      bias:   conv bias of shape (1,).
    Returns:
      (N, 1, H, W) output with x's dtype.
    """
    n, c, h, w = x_nchw.shape
    assert c == 1, "OneOperModel uses Conv2d(1, 1, 1): expects 1 input channel"

    total = n * c * h * w
    dtype = x_nchw.dtype

    # Parameters kept in f32 (matches Conv2d precision even for low-precision activations).
    w_s = weight.reshape(()).astype(jnp.float32)
    b_s = bias.reshape(()).astype(jnp.float32)

    # Small-size fast path: XLA's fused elementwise is already at roofline for tiny inputs
    # and avoids pallas_call launch + per-grid-step overhead.
    if total < min_pallas_elems:
        return (x_nchw.astype(jnp.float32) * w_s + b_s).astype(dtype)

    wb = jnp.stack([w_s, b_s])          # (2,) f32 -> SMEM
    flat = x_nchw.reshape(-1)           # contiguous reshape: zero-copy

    if total % LANE == 0:
        # --- lane-dense 2-D path (zero-copy reshape) ---
        rows = total // LANE
        if rows > TILE_R:
            tile_r = TILE_R
        elif rows >= 16:
            # Mid-size input: force >= 2 grid steps so v7x can shard across both TCs.
            tile_r = ((rows + 1) // 2 + 7) // 8 * 8
        else:
            tile_r = rows               # block == full array dims (always legal)
        grid_r = pl.cdiv(rows, tile_r)
        out = _affine_pallas(
            flat.reshape(rows, LANE), wb, (tile_r, LANE), (grid_r,), alias_input
        )
    else:
        # --- unaligned total: 1-D blocking over the flat array, no pad / no slice ---
        if total > block_1d:
            blk = max(128, (block_1d // 128) * 128)   # sub-block must be a multiple of 128
        elif total >= 2 * 128:
            blk = ((total + 1) // 2 + 127) // 128 * 128   # >= 2 grid steps where possible
        else:
            blk = total                                   # single full-array block
        grid_r = pl.cdiv(total, blk)
        out = _affine_pallas(flat, wb, (blk,), (grid_r,), alias_input)

    return out.reshape(n, c, h, w)


if __name__ == "__main__":
    key = jax.random.PRNGKey(0)
    k_x, k_w, k_b, k_x2, k_x3 = jax.random.split(key, 5)

    # Deterministic parameter init (same shapes as nn.Conv2d(1, 1, 1)).
    weight = jax.random.normal(k_w, (1, 1, 1, 1), dtype=jnp.float32)
    bias = jax.random.normal(k_b, (1,), dtype=jnp.float32)

    def ref_fn(x):
        # Reference in plain JAX: 1x1 conv (1->1 channel) == scalar affine.
        return x * weight.reshape(()) + bias.reshape(())

    # 1) Small aligned shape, forced through the Pallas 2-D lane-dense path (single block).
    x1 = jax.random.normal(k_x, (2, 1, 16, 16), dtype=jnp.float32)
    o1 = jax.block_until_ready(one_oper_model(x1, weight, bias, min_pallas_elems=0))
    assert o1.shape == x1.shape
    assert jnp.allclose(o1, ref_fn(x1), atol=1e-6, rtol=1e-6)

    # 2) Unaligned shape, forced through the Pallas 1-D path with a tiny block so the
    #    ragged (masked) last block is exercised (646 elems, block=256 -> grid of 3).
    x2 = jax.random.normal(k_x2, (2, 1, 17, 19), dtype=jnp.float32)
    o2 = jax.block_until_ready(
        one_oper_model(x2, weight, bias, min_pallas_elems=0, block_1d=256)
    )
    assert o2.shape == x2.shape
    assert jnp.allclose(o2, ref_fn(x2), atol=1e-6, rtol=1e-6)

    # 3) Aligned shape with a real multi-step 2-D grid (rows=16 -> tile_r=8 -> grid of 2).
    x3 = jax.random.normal(k_x3, (2, 1, 64, 64), dtype=jnp.float32)
    o3 = jax.block_until_ready(one_oper_model(x3, weight, bias, min_pallas_elems=0))
    assert o3.shape == x3.shape
    assert jnp.allclose(o3, ref_fn(x3), atol=1e-6, rtol=1e-6)

    # 4) Default auto behaviour: tiny input takes the XLA fast path (no pallas_call).
    o4 = jax.block_until_ready(one_oper_model(x1, weight, bias))
    assert jnp.allclose(o4, ref_fn(x1), atol=1e-6, rtol=1e-6)

    print("KERNEL_OK")
</pallas_src>

<mosaic_0001>
module attributes {stable_mosaic.version = 11 : i64} {
  func.func @_affine_kernel(%arg0: i32, %arg1: memref<2xf32, #tpu.memory_space<smem>>, %arg2: memref<1x512xf32, #tpu.memory_space<vmem>>, %arg3: memref<1x512xf32, #tpu.memory_space<vmem>>) attributes {dimension_semantics = [#tpu.dimension_semantics<parallel>], iteration_bounds = array<i64: 1>, scalar_prefetch = 0 : i64, scratch_operands = 0 : i64, tpu.core_type = #tpu.core_type<tc>, window_params = [{transform_indices = @transform_0, window_bounds = array<i64: 2>}, {transform_indices = @transform_1, window_bounds = array<i64: 1, 512>}, {transform_indices = @transform_2, window_bounds = array<i64: 1, 512>}]} {
    %c0 = arith.constant 0 : index
    %0 = memref.load %arg1[%c0] : memref<2xf32, #tpu.memory_space<smem>>
    %c1 = arith.constant 1 : index
    %1 = memref.load %arg1[%c1] : memref<2xf32, #tpu.memory_space<smem>>
    %c0_0 = arith.constant 0 : index
    %c0_1 = arith.constant 0 : index
    %2 = vector.load %arg2[%c0_0, %c0_1] : memref<1x512xf32, #tpu.memory_space<vmem>>, vector<1x512xf32>
    %3 = vector.broadcast %0 : f32 to vector<1x512xf32>
    %4 = arith.mulf %2, %3 : vector<1x512xf32>
    %5 = vector.broadcast %1 : f32 to vector<1x512xf32>
    %6 = arith.addf %4, %5 : vector<1x512xf32>
    %c0_2 = arith.constant 0 : index
    %c0_3 = arith.constant 0 : index
    %7 = vector.load %arg3[%c0_2, %c0_3] : memref<1x512xf32, #tpu.memory_space<vmem>>, vector<1x512xf32>
    tpu.vector_store %arg3[%c0_2, %c0_3], %6 {strides = array<i32>} : memref<1x512xf32, #tpu.memory_space<vmem>>, vector<1x512xf32>,
    return
  }
  func.func @transform_0(%arg0: i32) -> i32 {
    %c0_i32 = arith.constant 0 : i32
    %c0_i32_0 = arith.constant 0 : i32
    return %c0_i32 : i32
  }
  func.func @transform_1(%arg0: i32) -> (i32, i32) {
    %c0_i32 = arith.constant 0 : i32
    %c0_i32_0 = arith.constant 0 : i32
    return %arg0, %c0_i32 : i32, i32
  }
  func.func @transform_2(%arg0: i32) -> (i32, i32) {
    %c0_i32 = arith.constant 0 : i32
    %c0_i32_0 = arith.constant 0 : i32
    return %arg0, %c0_i32 : i32, i32
  }
}

</mosaic_0001>

<llo_original>
// kernel: tpu_custom_call.1
$region0: #{tpu_custom_call.1}
  #allocation0 [shape = 'u32[]', space=smem, size = 0x4, offset = 0x4, fixed_abs, tag = 'smem constant byte address 0x4 - core index']
  #allocation1 [shape = 'u32[144,128]{1,0:T(1,128)}', space=vmem, size = 0x12000, scoped, tag = 'internal scratch']
  %s0 = inlined_call_operand.hbm [shape: f32[2], index: 0, kind: input, shape index: {}]
  %s1 = inlined_call_operand.hbm [shape: f32[1,512], index: 1, kind: input, shape index: {}]
  %s2 = inlined_call_operand.hbm [shape: f32[1,512], index: 2, kind: output, shape index: {}]
  %s3 = sld [smem:[#allocation0]]
  $region26: #{tpu_custom_call.1} parent=0
    _
  %s5 = ssub.s32 1, %s3
  %s6 = scalar_select 0, %s5, %s3
  $region1: #{tpu_custom_call.1} parent=0
    #allocation2 [shape = 'u8[512]{0}', space=smem, size = 0x200, scoped, tag = 'input window, operand 0, single buffered']
    #allocation3 [shape = 's32[1]{0}', space=sflag, size = 0x4, scoped, tag = 'scoped memory for tpu_custom_call.1']
    #allocation4 [shape = 's32[1]{0}', space=sflag, size = 0x4, scoped, tag = 'scoped memory for tpu_custom_call.1']
    #allocation5 [shape = 's32[1]{0}', space=sflag, size = 0x4, scoped, tag = 'scoped memory for tpu_custom_call.1']
    #allocation6 [shape = 'u8[2048]{0}', space=vmem, size = 0x800, scoped, tag = 'input window, operand 1, single buffered']
    #allocation7 [shape = 'u8[2048]{0}', space=vmem, size = 0x800, scoped, tag = 'output window, operand 0, single buffered']
    %7 = vsyncpa [#allocation5], 0
    %8 = vsyncpa [#allocation3], 0
    %9 = vsyncpa [#allocation4], 0
    // Predicated region
    $region2: #{tpu_custom_call.1} parent=1 // pred_check
      _
    $region3: #{tpu_custom_call.1} parent=1 // pred_check_branch
      %11 = sbr.rel (0) target = $region5
    $region4: #{tpu_custom_call.1} parent=1 // pred_region
      %s13 = ssub.s32 16, 16
      %14 = vsyncadd [#allocation5], %s13
      %17 = dma.hbm_to_smem %s0, 16, [#allocation2], [#allocation5]
    $region5: #{tpu_custom_call.1} parent=1 // pred_fallthru
      _
    // Predicated region
    $region6: #{tpu_custom_call.1} parent=1 // pred_check
      _
    $region7: #{tpu_custom_call.1} parent=1 // pred_check_branch
      %19 = sbr.rel (0) target = $region9
    $region8: #{tpu_custom_call.1} parent=1 // pred_region
      %s21 = ssub.s32 64, 64
      %22 = vsyncadd [#allocation3], %s21
      %s24 = sshll.u32 [#allocation6], 4
      %s25 = int_to_ptr.vmem [resolvable:$true] %s24
      %27 = dma.hbm_to_vmem [thread:$0]  %s1, 64, %s25, [#allocation3]
    $region9: #{tpu_custom_call.1} parent=1 // pred_fallthru
      _
    // Predicated region
    $region10: #{tpu_custom_call.1} parent=1 // pred_check
      _
    $region11: #{tpu_custom_call.1} parent=1 // pred_check_branch
      %29 = sbr.rel (0) target = $region13
    $region12: #{tpu_custom_call.1} parent=1 // pred_region
      %30 = dma.done [#allocation5], 16
    $region13: #{tpu_custom_call.1} parent=1 // pred_fallthru
      _
    // Predicated region
    $region14: #{tpu_custom_call.1} parent=1 // pred_check
      _
    $region15: #{tpu_custom_call.1} parent=1 // pred_check_branch
      %32 = sbr.rel (0) target = $region17
    $region16: #{tpu_custom_call.1} parent=1 // pred_region
      %33 = dma.done [#allocation3], 64
    $region17: #{tpu_custom_call.1} parent=1 // pred_fallthru
      _
    %34 = sfence
    %s35 = sld [smem:[#allocation2]]
    %s36 = sld [smem:[#allocation2 + $0x1]]
    %v37 = vld [vmem:[#allocation6] sm:$0xf]
    %v38 = vstv %s35
    %v39 = vmul.f32 %v37, %v38
    %v40 = vstv %s36
    %v41 = vadd.f32 %v39, %v40
    %v42 = vlaneseq
    %vm43 = vcmp.ge.s32.totalorder %v42, 0
    %vm44 = vcmp.lt.s32.totalorder %v42, 512
    %vm45 = vmand %vm43, %vm44
    %46 = vst.msk [vmem:[#allocation7] sm:$0xf] %vm45, %v41
    // Predicated region
    $region18: #{tpu_custom_call.1} parent=1 // pred_check
      _
    $region19: #{tpu_custom_call.1} parent=1 // pred_check_branch
      %48 = sbr.rel (0) target = $region21
    $region20: #{tpu_custom_call.1} parent=1 // pred_region
      %s50 = ssub.s32 64, 64
      %51 = vsyncadd [#allocation4], %s50
      %s53 = sshll.u32 [#allocation7], 4
      %s54 = int_to_ptr.vmem [resolvable:$true] %s53
      %56 = dma.vmem_to_hbm [thread:$0]  %s54, 64, %s2, [#allocation4]
    $region21: #{tpu_custom_call.1} parent=1 // pred_fallthru
      _
    // Predicated region
    $region22: #{tpu_custom_call.1} parent=1 // pred_check
      _
    $region23: #{tpu_custom_call.1} parent=1 // pred_check_branch
      %58 = sbr.rel (0) target = $region25
    $region24: #{tpu_custom_call.1} parent=1 // pred_region
      %59 = dma.done [#allocation4], 64
    $region25: #{tpu_custom_call.1} parent=1 // pred_fallthru
      _
    %60 = vsyncpa [#allocation3], 1
    %61 = vsyncpa [#allocation4], 1
    %62 = vsyncpa [#allocation5], 1

</llo_original>
